<compile_context>
chip_gen: v5e
topology: v5e:2x2
jax: 0.10.0
libtpu: 0.0.40
codegen_flags: <defaults>
</compile_context>

<pallas_src>
import jax
import jax.numpy as jnp
import numpy as np
from jax import lax
from jax.experimental import pallas as pl
from jax.experimental.pallas import tpu as pltpu


# ---------------------------------------------------------------------------
# Kernel 1: strided Conv3d(k=2, stride=2) ("down_conv") + bias + PReLU.
# stride == kernel  =>  non-overlapping 2x2x2 patches, i.e. a plain
#   (rows, 8*Cin) @ (8*Cin, Cout) matmul, row-tiled over the grid.
# ---------------------------------------------------------------------------
def _down_matmul_kernel(x_ref, w_ref, b_ref, a_ref, o_ref):
    y = jnp.dot(x_ref[...], w_ref[...], preferred_element_type=jnp.float32)
    y = y + b_ref[...]
    o_ref[...] = jnp.where(y > 0, y, a_ref[...] * y)       # per-channel PReLU


def down_conv_prelu(x_ncdhw, w_down, b_down, a_prelu, *, tile_rows=1024):
    """x: (N, Cin, D, H, W) -> (N, D/2, H/2, W/2, Cout) channels-last."""
    N, Cin, D, H, W = x_ncdhw.shape
    Co = w_down.shape[0]
    D2, H2, W2 = D // 2, H // 2, W // 2

    # NCDHW -> NDHWC, then gather the non-overlapping 2x2x2 patches as columns
    # (column order = (kd, kh, kw, ci)); this is XLA glue, done once.
    x_cl = jnp.transpose(x_ncdhw, (0, 2, 3, 4, 1))
    xp = x_cl.reshape(N, D2, 2, H2, 2, W2, 2, Cin)
    xp = jnp.transpose(xp, (0, 1, 3, 5, 2, 4, 6, 7)).reshape(N * D2 * H2 * W2, 8 * Cin)
    # weights (Co, Ci, 2,2,2) -> (kd, kh, kw, ci, co) -> (8*Cin, Co)
    w_flat = jnp.transpose(w_down, (2, 3, 4, 1, 0)).reshape(8 * Cin, Co)
    b2 = b_down.reshape(1, Co)
    a2 = a_prelu.reshape(1, Co)

    rows = xp.shape[0]
    tm = max(8, (min(tile_rows, rows) // 8) * 8)   # multiple of 8, never full-extent fallback
    n_blocks = -(-rows // tm)
    rows_pad = n_blocks * tm
    if rows_pad != rows:
        xp = jnp.pad(xp, ((0, rows_pad - rows), (0, 0)))

    cost = pl.CostEstimate(
        flops=2 * rows_pad * 8 * Cin * Co,
        transcendentals=0,
        bytes_accessed=4 * (rows_pad * 8 * Cin + 8 * Cin * Co + rows_pad * Co))

    y = pl.pallas_call(
        _down_matmul_kernel,
        out_shape=jax.ShapeDtypeStruct((rows_pad, Co), jnp.float32),
        grid=(n_blocks,),
        in_specs=[
            pl.BlockSpec((tm, 8 * Cin), lambda i: (i, 0)),
            pl.BlockSpec((8 * Cin, Co), lambda i: (0, 0)),   # resident weights
            pl.BlockSpec((1, Co), lambda i: (0, 0)),
            pl.BlockSpec((1, Co), lambda i: (0, 0)),
        ],
        out_specs=pl.BlockSpec((tm, Co), lambda i: (i, 0)),
        compiler_params=pltpu.CompilerParams(dimension_semantics=("parallel",)),
        cost_estimate=cost,
    )(xp, w_flat, b2, a2)

    y = y[:rows]
    return y.reshape(N, D2, H2, W2, Co)


# ---------------------------------------------------------------------------
# Kernel 2: Conv3d(C->C, k=5, padding=2*dil, dilation=dil) + PReLU
# (+ residual add on the last layer).
#   grid = (N, D//TD); each step produces TD output depth planes.
#   Depth halo: two Blocked(TD) slabs (blocks d and d+1) concatenated in-kernel
#   (requires TD >= 4*dil, so halo overfetch factor is exactly 2x).
#   kw im2col hoisted once per step; if 5*C < 256 the kh taps are fused into
#   the contraction (K = 25*C, 5 matmuls/step), else 25 matmuls with K = 5*C.
#   Accumulation in registers; output written once.
# ---------------------------------------------------------------------------
def conv5_prelu_layer(x_ndhwc, w_oidhw, b, a_prelu, dilation, residual=None, *, td=4):
    """x: (N, D, H, W, C) channels-last. Returns flat (N, D*H*W, C)."""
    N, D, H, W, C = x_ndhwc.shape
    dil = int(dilation)
    pad = 2 * dil
    HW = H * W
    Hp, Wp = H + 2 * pad, W + 2 * pad

    # Depth tile size (sweep 2-8; keep D//TD even-ish for 2-TC v7x balance).
    TD = max(int(td), 4 * dil)            # double-block halo needs TD >= 4*dil
    nD = -(-D // TD)
    Dv = nD * TD                          # depth rounded up to a TD multiple
    Dslab = TD + 4 * dil
    front = pad
    back = (nD + 1) * TD - D - front      # >= 2*dil, and block d+1 always exists
    xp = jnp.pad(x_ndhwc, ((0, 0), (front, back), (pad, pad), (pad, pad), (0, 0)))

    fuse_kh = (5 * C) < 256               # under-filled MXU depth -> fuse kh taps
    w_t = jnp.transpose(w_oidhw, (2, 3, 4, 1, 0))        # (kd, kh, kw, ci, co)
    if fuse_kh:
        w_prep = w_t.reshape(5, 25 * C, C)                # contraction = (kh, kw, ci)
    else:
        w_prep = w_t.reshape(25, 5 * C, C)                # [kd*5+kh], contraction = (kw, ci)
    b2 = b.reshape(1, C)
    a2 = a_prelu.reshape(1, C)

    add_res = residual is not None
    if add_res:
        res = residual.reshape(N, D * HW, C)
        if Dv != D:
            res = jnp.pad(res, ((0, 0), (0, (Dv - D) * HW), (0, 0)))

    def kernel(*refs):
        if add_res:
            xlo, xhi, w_ref, b_ref, a_ref, res_ref, o_ref = refs
        else:
            xlo, xhi, w_ref, b_ref, a_ref, o_ref = refs

        # Assemble the depth slab: TD output planes + 4*dil halo planes.
        slab = jnp.concatenate([xlo[...], xhi[...]], axis=0)[:Dslab]   # (Dslab,Hp,Wp,C)
        # Hoisted kw im2col, built once per grid step: (Dslab, Hp, W, 5C).
        pw = jnp.concatenate(
            [slab[:, :, kw * dil:kw * dil + W, :] for kw in range(5)], axis=-1)

        acc = None
        if fuse_kh:
            # Hoisted kh im2col: (Dslab, H, W, 25C); 5 matmuls with K = 25*C.
            phw = jnp.concatenate(
                [pw[:, kh * dil:kh * dil + H] for kh in range(5)], axis=-1)
            for kd in range(5):
                p = phw[kd * dil:kd * dil + TD].reshape(TD * HW, 25 * C)
                y = jnp.dot(p, w_ref[kd], preferred_element_type=jnp.float32)
                acc = y if acc is None else acc + y
        else:
            for kd in range(5):
                sub = pw[kd * dil:kd * dil + TD]                      # (TD, Hp, W, 5C)
                for kh in range(5):
                    p = sub[:, kh * dil:kh * dil + H].reshape(TD * HW, 5 * C)
                    y = jnp.dot(p, w_ref[kd * 5 + kh],
                                preferred_element_type=jnp.float32)
                    acc = y if acc is None else acc + y

        y = acc + b_ref[...]
        y = jnp.where(y > 0, y, a_ref[...] * y)                       # per-channel PReLU
        if add_res:
            y = y + res_ref[...]                                      # torch.add(out, down)
        o_ref[...] = y

    in_specs = [
        pl.BlockSpec((None, TD, Hp, Wp, C), lambda n, d: (n, d, 0, 0, 0)),
        pl.BlockSpec((None, TD, Hp, Wp, C), lambda n, d: (n, d + 1, 0, 0, 0)),
        pl.BlockSpec(w_prep.shape, lambda n, d: (0, 0, 0)),            # resident weights
        pl.BlockSpec((1, C), lambda n, d: (0, 0)),
        pl.BlockSpec((1, C), lambda n, d: (0, 0)),
    ]
    inputs = [xp, xp, w_prep, b2, a2]
    if add_res:
        in_specs.append(pl.BlockSpec((None, TD * HW, C), lambda n, d: (n, d, 0)))
        inputs.append(res)

    n_out = N * Dv * HW * C
    cost = pl.CostEstimate(
        flops=2 * N * Dv * HW * 125 * C * C,
        transcendentals=0,
        bytes_accessed=4 * (2 * xp.size + w_prep.size
                            + n_out * (2 if add_res else 1)))

    out = pl.pallas_call(
        kernel,
        out_shape=jax.ShapeDtypeStruct((N, Dv * HW, C), jnp.float32),
        grid=(N, nD),
        in_specs=in_specs,
        out_specs=pl.BlockSpec((None, TD * HW, C), lambda n, d: (n, d, 0)),
        compiler_params=pltpu.CompilerParams(
            dimension_semantics=("parallel", "parallel")),
        cost_estimate=cost,
    )(*inputs)
    return out[:, :D * HW, :]                                          # drop depth padding


# ---------------------------------------------------------------------------
# Full DownTransition forward (NCDHW in / NCDHW out).
# ---------------------------------------------------------------------------
def down_transition(x, params, dilation=1):
    down = down_conv_prelu(x, params["down_w"], params["down_b"], params["prelu1"])
    N, D2, H2, W2, C = down.shape
    down_flat = down.reshape(N, D2 * H2 * W2, C)      # flat lane-dense residual

    out = down
    L = len(params["conv_ws"])
    for i in range(L):
        res = down_flat if i == L - 1 else None
        out_flat = conv5_prelu_layer(out, params["conv_ws"][i], params["conv_bs"][i],
                                     params["conv_as"][i], dilation, residual=res)
        out = out_flat.reshape(N, D2, H2, W2, C)      # free reshape (split D*HW)
    if L == 0:
        out = out + down
    # TODO(synk): attention_module (ChannelGate/SpatialGate with BatchNorm running
    # stats) not implemented; default DownTransition(attention_module=False) path.
    return jnp.transpose(out, (0, 4, 1, 2, 3))        # NDHWC -> NCDHW


# ---------------------------------------------------------------------------
# Pure-JAX reference (mirrors the PyTorch module) for verification.
# ---------------------------------------------------------------------------
def _prelu_nc(x, a):
    return jnp.where(x > 0, x, a.reshape(1, -1, 1, 1, 1) * x)


def reference(x, params, dilation=1):
    dn = ("NCDHW", "OIDHW", "NCDHW")
    down = lax.conv_general_dilated(x, params["down_w"], window_strides=(2, 2, 2),
                                    padding=[(0, 0)] * 3, dimension_numbers=dn)
    down = _prelu_nc(down + params["down_b"].reshape(1, -1, 1, 1, 1), params["prelu1"])
    out = down
    p = 2 * dilation
    for w, b, a in zip(params["conv_ws"], params["conv_bs"], params["conv_as"]):
        out = lax.conv_general_dilated(out, w, window_strides=(1, 1, 1),
                                       padding=[(p, p)] * 3,
                                       rhs_dilation=(dilation,) * 3,
                                       dimension_numbers=dn)
        out = _prelu_nc(out + b.reshape(1, -1, 1, 1, 1), a)
    return out + down


# ---------------------------------------------------------------------------
# Deterministic parameter setup (synthetic; no checkpoint loading).
# ---------------------------------------------------------------------------
def make_params(key, in_channels, num_layers):
    out_channels = 2 * in_channels
    ks = jax.random.split(key, 3 + 3 * num_layers)
    params = {
        "down_w": 0.2 * jax.random.normal(ks[0], (out_channels, in_channels, 2, 2, 2),
                                          jnp.float32),
        "down_b": 0.1 * jax.random.normal(ks[1], (out_channels,), jnp.float32),
        "prelu1": 0.25 + 0.1 * jax.random.normal(ks[2], (out_channels,), jnp.float32),
        "conv_ws": [], "conv_bs": [], "conv_as": [],
    }
    for i in range(num_layers):
        params["conv_ws"].append(0.05 * jax.random.normal(
            ks[3 + 3 * i], (out_channels, out_channels, 5, 5, 5), jnp.float32))
        params["conv_bs"].append(0.1 * jax.random.normal(
            ks[4 + 3 * i], (out_channels,), jnp.float32))
        params["conv_as"].append(0.25 + 0.1 * jax.random.normal(
            ks[5 + 3 * i], (out_channels,), jnp.float32))
    return params


if __name__ == "__main__":
    N, IN_CH, NUM_LAYERS, DIL = 2, 8, 2, 1
    D = H = W = 16

    key = jax.random.PRNGKey(0)
    kx, kp = jax.random.split(key)
    x = jax.random.normal(kx, (N, IN_CH, D, H, W), jnp.float32)
    params = make_params(kp, IN_CH, NUM_LAYERS)

    out = jax.block_until_ready(down_transition(x, params, dilation=DIL))

    ref = jax.block_until_ready(reference(x, params, dilation=DIL))
    assert out.shape == (N, 2 * IN_CH, D // 2, H // 2, W // 2), out.shape
    np.testing.assert_allclose(np.asarray(out), np.asarray(ref), rtol=1e-2, atol=1e-2)

    print("KERNEL_OK")
</pallas_src>

<mosaic_0001>
module attributes {stable_mosaic.version = 11 : i64} {
  func.func @_down_matmul_kernel(%arg0: i32, %arg1: memref<1024x64xf32, #tpu.memory_space<vmem>>, %arg2: memref<64x16xf32, #tpu.memory_space<vmem>>, %arg3: memref<1x16xf32, #tpu.memory_space<vmem>>, %arg4: memref<1x16xf32, #tpu.memory_space<vmem>>, %arg5: memref<1024x16xf32, #tpu.memory_space<vmem>>) attributes {dimension_semantics = [#tpu.dimension_semantics<parallel>], iteration_bounds = array<i64: 1>, scalar_prefetch = 0 : i64, scratch_operands = 0 : i64, tpu.core_type = #tpu.core_type<tc>, window_params = [{transform_indices = @transform_0, window_bounds = array<i64: 1024, 64>}, {pipeline_mode = #tpu.pipeline_mode<synchronous>, transform_indices = @transform_1, window_bounds = array<i64: 64, 16>}, {pipeline_mode = #tpu.pipeline_mode<synchronous>, transform_indices = @transform_2, window_bounds = array<i64: 1, 16>}, {pipeline_mode = #tpu.pipeline_mode<synchronous>, transform_indices = @transform_3, window_bounds = array<i64: 1, 16>}, {transform_indices = @transform_4, window_bounds = array<i64: 1024, 16>}]} {
    %c0 = arith.constant 0 : index
    %c0_0 = arith.constant 0 : index
    %0 = vector.load %arg1[%c0, %c0_0] : memref<1024x64xf32, #tpu.memory_space<vmem>>, vector<1024x64xf32>
    %c0_1 = arith.constant 0 : index
    %c0_2 = arith.constant 0 : index
    %1 = vector.load %arg2[%c0_1, %c0_2] : memref<64x16xf32, #tpu.memory_space<vmem>>, vector<64x16xf32>
    %cst = arith.constant dense<0.000000e+00> : vector<1024x16xf32>
    %2 = tpu.matmul %0, %1, %cst {dimension_numbers = #tpu.dot_dimension_numbers<[1], [0], [0], [1], [0, 0, 1, 1], [], []>} : vector<1024x64xf32>, vector<64x16xf32>, vector<1024x16xf32> -> vector<1024x16xf32>
    %c0_3 = arith.constant 0 : index
    %c0_4 = arith.constant 0 : index
    %3 = vector.load %arg3[%c0_3, %c0_4] : memref<1x16xf32, #tpu.memory_space<vmem>>, vector<1x16xf32>
    %4 = vector.broadcast %3 : vector<1x16xf32> to vector<1024x16xf32>
    %5 = arith.addf %2, %4 : vector<1024x16xf32>
    %cst_5 = arith.constant 0.000000e+00 : f32
    %6 = vector.broadcast %cst_5 : f32 to vector<1024x16xf32>
    %7 = arith.cmpf ogt, %5, %6 : vector<1024x16xf32>
    %c0_6 = arith.constant 0 : index
    %c0_7 = arith.constant 0 : index
    %8 = vector.load %arg4[%c0_6, %c0_7] : memref<1x16xf32, #tpu.memory_space<vmem>>, vector<1x16xf32>
    %9 = vector.broadcast %8 : vector<1x16xf32> to vector<1024x16xf32>
    %10 = arith.mulf %9, %5 : vector<1024x16xf32>
    %11 = arith.select %7, %5, %10 : vector<1024x16xi1>, vector<1024x16xf32>
    %c0_8 = arith.constant 0 : index
    %c0_9 = arith.constant 0 : index
    %12 = vector.load %arg5[%c0_8, %c0_9] : memref<1024x16xf32, #tpu.memory_space<vmem>>, vector<1024x16xf32>
    tpu.vector_store %arg5[%c0_8, %c0_9], %11 {strides = array<i32>} : memref<1024x16xf32, #tpu.memory_space<vmem>>, vector<1024x16xf32>,
    return
  }
  func.func @transform_0(%arg0: i32) -> (i32, i32) {
    %c0_i32 = arith.constant 0 : i32
    %c0_i32_0 = arith.constant 0 : i32
    return %arg0, %c0_i32 : i32, i32
  }
  func.func @transform_1(%arg0: i32) -> (i32, i32) {
    %c0_i32 = arith.constant 0 : i32
    %c0_i32_0 = arith.constant 0 : i32
    %c0_i32_1 = arith.constant 0 : i32
    return %c0_i32, %c0_i32_0 : i32, i32
  }
  func.func @transform_2(%arg0: i32) -> (i32, i32) {
    %c0_i32 = arith.constant 0 : i32
    %c0_i32_0 = arith.constant 0 : i32
    %c0_i32_1 = arith.constant 0 : i32
    return %c0_i32, %c0_i32_0 : i32, i32
  }
  func.func @transform_3(%arg0: i32) -> (i32, i32) {
    %c0_i32 = arith.constant 0 : i32
    %c0_i32_0 = arith.constant 0 : i32
    %c0_i32_1 = arith.constant 0 : i32
    return %c0_i32, %c0_i32_0 : i32, i32
  }
  func.func @transform_4(%arg0: i32) -> (i32, i32) {
    %c0_i32 = arith.constant 0 : i32
    %c0_i32_0 = arith.constant 0 : i32
    return %arg0, %c0_i32 : i32, i32
  }
}

</mosaic_0001>

<llo_original>
// kernel: tpu_custom_call.1
$region0: #{tpu_custom_call.1}
  #allocation0 [shape = 'u32[]', space=smem, size = 0x4, offset = 0x4, fixed_abs, tag = 'smem constant byte address 0x4 - core index']
  #allocation1 [shape = 'u32[72,128]{1,0:T(1,128)}', space=vmem, size = 0x9000, scoped, tag = 'internal scratch']
  %s0 = inlined_call_operand.vmem [shape: f32[1024,64], index: 0, kind: input, shape index: {}]
  %s1 = inlined_call_operand.vmem [shape: f32[64,16], index: 1, kind: input, shape index: {}]
  %s2 = inlined_call_operand.vmem [shape: f32[1,16], index: 2, kind: input, shape index: {}]
  %s3 = inlined_call_operand.vmem [shape: f32[1,16], index: 3, kind: input, shape index: {}]
  %s4 = inlined_call_operand.vmem [shape: f32[1024,16], index: 4, kind: output, shape index: {}]
  %s5 = sld [smem:[#allocation0]]
  $region26: #{tpu_custom_call.1} parent=0
    _
  %s7 = ssub.s32 1, %s5
  %s8 = scalar_select 0, %s7, %s5
  // Predicated region
  $region2: #{tpu_custom_call.1} parent=0 // pred_check
    _
  $region3: #{tpu_custom_call.1} parent=0 // pred_check_branch
    %10 = sbr.rel (0) target = $region5
  $region4: #{tpu_custom_call.1} parent=0 // pred_region
    _
  $region5: #{tpu_custom_call.1} parent=0 // pred_fallthru
    _
  // Predicated region
  $region6: #{tpu_custom_call.1} parent=0 // pred_check
    _
  $region7: #{tpu_custom_call.1} parent=0 // pred_check_branch
    %12 = sbr.rel (0) target = $region9
  $region8: #{tpu_custom_call.1} parent=0 // pred_region
    _
  $region9: #{tpu_custom_call.1} parent=0 // pred_fallthru
    _
  // Predicated region
  $region10: #{tpu_custom_call.1} parent=0 // pred_check
    _
  $region11: #{tpu_custom_call.1} parent=0 // pred_check_branch
    %14 = sbr.rel (0) target = $region13
  $region12: #{tpu_custom_call.1} parent=0 // pred_region
    _
  $region13: #{tpu_custom_call.1} parent=0 // pred_fallthru
    _
  // Predicated region
  $region14: #{tpu_custom_call.1} parent=0 // pred_check
    _
  $region15: #{tpu_custom_call.1} parent=0 // pred_check_branch
    %16 = sbr.rel (0) target = $region17
  $region16: #{tpu_custom_call.1} parent=0 // pred_region
    _
  $region17: #{tpu_custom_call.1} parent=0 // pred_fallthru
    _
  %v17 = vld [vmem:[%s0] sm:$0xff]
  %v18 = vld [vmem:[%s0 + $0x8] sm:$0xff]
  %v19 = vld [vmem:[%s0 + $0x10] sm:$0xff]
  %v20 = vld [vmem:[%s0 + $0x18] sm:$0xff]
  %v21 = vld [vmem:[%s0 + $0x20] sm:$0xff]
  %v22 = vld [vmem:[%s0 + $0x28] sm:$0xff]
  %v23 = vld [vmem:[%s0 + $0x30] sm:$0xff]
  %v24 = vld [vmem:[%s0 + $0x38] sm:$0xff]
  %v25 = vld [vmem:[%s0 + $0x40] sm:$0xff]
  %v26 = vld [vmem:[%s0 + $0x48] sm:$0xff]
  %v27 = vld [vmem:[%s0 + $0x50] sm:$0xff]
  %v28 = vld [vmem:[%s0 + $0x58] sm:$0xff]
  %v29 = vld [vmem:[%s0 + $0x60] sm:$0xff]
  %v30 = vld [vmem:[%s0 + $0x68] sm:$0xff]
  %v31 = vld [vmem:[%s0 + $0x70] sm:$0xff]
  %v32 = vld [vmem:[%s0 + $0x78] sm:$0xff]
  %v33 = vld [vmem:[%s0 + $0x80] sm:$0xff]
  %v34 = vld [vmem:[%s0 + $0x88] sm:$0xff]
  %v35 = vld [vmem:[%s0 + $0x90] sm:$0xff]
  %v36 = vld [vmem:[%s0 + $0x98] sm:$0xff]
  %v37 = vld [vmem:[%s0 + $0xa0] sm:$0xff]
  %v38 = vld [vmem:[%s0 + $0xa8] sm:$0xff]
  %v39 = vld [vmem:[%s0 + $0xb0] sm:$0xff]
  %v40 = vld [vmem:[%s0 + $0xb8] sm:$0xff]
  %v41 = vld [vmem:[%s0 + $0xc0] sm:$0xff]
  %v42 = vld [vmem:[%s0 + $0xc8] sm:$0xff]
  %v43 = vld [vmem:[%s0 + $0xd0] sm:$0xff]
  %v44 = vld [vmem:[%s0 + $0xd8] sm:$0xff]
  %v45 = vld [vmem:[%s0 + $0xe0] sm:$0xff]
  %v46 = vld [vmem:[%s0 + $0xe8] sm:$0xff]
  %v47 = vld [vmem:[%s0 + $0xf0] sm:$0xff]
  %v48 = vld [vmem:[%s0 + $0xf8] sm:$0xff]
  %v49 = vld [vmem:[%s0 + $0x100] sm:$0xff]
  %v50 = vld [vmem:[%s0 + $0x108] sm:$0xff]
  %v51 = vld [vmem:[%s0 + $0x110] sm:$0xff]
  %v52 = vld [vmem:[%s0 + $0x118] sm:$0xff]
  %v53 = vld [vmem:[%s0 + $0x120] sm:$0xff]
  %v54 = vld [vmem:[%s0 + $0x128] sm:$0xff]
  %v55 = vld [vmem:[%s0 + $0x130] sm:$0xff]
  %v56 = vld [vmem:[%s0 + $0x138] sm:$0xff]
  %v57 = vld [vmem:[%s0 + $0x140] sm:$0xff]
  %v58 = vld [vmem:[%s0 + $0x148] sm:$0xff]
  %v59 = vld [vmem:[%s0 + $0x150] sm:$0xff]
  %v60 = vld [vmem:[%s0 + $0x158] sm:$0xff]
  %v61 = vld [vmem:[%s0 + $0x160] sm:$0xff]
  %v62 = vld [vmem:[%s0 + $0x168] sm:$0xff]
  %v63 = vld [vmem:[%s0 + $0x170] sm:$0xff]
  %v64 = vld [vmem:[%s0 + $0x178] sm:$0xff]
  %v65 = vld [vmem:[%s0 + $0x180] sm:$0xff]
  %v66 = vld [vmem:[%s0 + $0x188] sm:$0xff]
  %v67 = vld [vmem:[%s0 + $0x190] sm:$0xff]
  %v68 = vld [vmem:[%s0 + $0x198] sm:$0xff]
  %v69 = vld [vmem:[%s0 + $0x1a0] sm:$0xff]
  %v70 = vld [vmem:[%s0 + $0x1a8] sm:$0xff]
  %v71 = vld [vmem:[%s0 + $0x1b0] sm:$0xff]
  %v72 = vld [vmem:[%s0 + $0x1b8] sm:$0xff]
  %v73 = vld [vmem:[%s0 + $0x1c0] sm:$0xff]
  %v74 = vld [vmem:[%s0 + $0x1c8] sm:$0xff]
  %v75 = vld [vmem:[%s0 + $0x1d0] sm:$0xff]
  %v76 = vld [vmem:[%s0 + $0x1d8] sm:$0xff]
  %v77 = vld [vmem:[%s0 + $0x1e0] sm:$0xff]
  %v78 = vld [vmem:[%s0 + $0x1e8] sm:$0xff]
  %v79 = vld [vmem:[%s0 + $0x1f0] sm:$0xff]
  %v80 = vld [vmem:[%s0 + $0x1f8] sm:$0xff]
  %v81 = vld [vmem:[%s0 + $0x200] sm:$0xff]
  %v82 = vld [vmem:[%s0 + $0x208] sm:$0xff]
  %v83 = vld [vmem:[%s0 + $0x210] sm:$0xff]
  %v84 = vld [vmem:[%s0 + $0x218] sm:$0xff]
  %v85 = vld [vmem:[%s0 + $0x220] sm:$0xff]
  %v86 = vld [vmem:[%s0 + $0x228] sm:$0xff]
  %v87 = vld [vmem:[%s0 + $0x230] sm:$0xff]
  %v88 = vld [vmem:[%s0 + $0x238] sm:$0xff]
  %v89 = vld [vmem:[%s0 + $0x240] sm:$0xff]
  %v90 = vld [vmem:[%s0 + $0x248] sm:$0xff]
  %v91 = vld [vmem:[%s0 + $0x250] sm:$0xff]
  %v92 = vld [vmem:[%s0 + $0x258] sm:$0xff]
  %v93 = vld [vmem:[%s0 + $0x260] sm:$0xff]
  %v94 = vld [vmem:[%s0 + $0x268] sm:$0xff]
  %v95 = vld [vmem:[%s0 + $0x270] sm:$0xff]
  %v96 = vld [vmem:[%s0 + $0x278] sm:$0xff]
  %v97 = vld [vmem:[%s0 + $0x280] sm:$0xff]
  %v98 = vld [vmem:[%s0 + $0x288] sm:$0xff]
  %v99 = vld [vmem:[%s0 + $0x290] sm:$0xff]
  %v100 = vld [vmem:[%s0 + $0x298] sm:$0xff]
  %v101 = vld [vmem:[%s0 + $0x2a0] sm:$0xff]
  %v102 = vld [vmem:[%s0 + $0x2a8] sm:$0xff]
  %v103 = vld [vmem:[%s0 + $0x2b0] sm:$0xff]
  %v104 = vld [vmem:[%s0 + $0x2b8] sm:$0xff]
  %v105 = vld [vmem:[%s0 + $0x2c0] sm:$0xff]
  %v106 = vld [vmem:[%s0 + $0x2c8] sm:$0xff]
  %v107 = vld [vmem:[%s0 + $0x2d0] sm:$0xff]
  %v108 = vld [vmem:[%s0 + $0x2d8] sm:$0xff]
  %v109 = vld [vmem:[%s0 + $0x2e0] sm:$0xff]
  %v110 = vld [vmem:[%s0 + $0x2e8] sm:$0xff]
  %v111 = vld [vmem:[%s0 + $0x2f0] sm:$0xff]
  %v112 = vld [vmem:[%s0 + $0x2f8] sm:$0xff]
  %v113 = vld [vmem:[%s0 + $0x300] sm:$0xff]
  %v114 = vld [vmem:[%s0 + $0x308] sm:$0xff]
  %v115 = vld [vmem:[%s0 + $0x310] sm:$0xff]
  %v116 = vld [vmem:[%s0 + $0x318] sm:$0xff]
  %v117 = vld [vmem:[%s0 + $0x320] sm:$0xff]
  %v118 = vld [vmem:[%s0 + $0x328] sm:$0xff]
  %v119 = vld [vmem:[%s0 + $0x330] sm:$0xff]
  %v120 = vld [vmem:[%s0 + $0x338] sm:$0xff]
  %v121 = vld [vmem:[%s0 + $0x340] sm:$0xff]
  %v122 = vld [vmem:[%s0 + $0x348] sm:$0xff]
  %v123 = vld [vmem:[%s0 + $0x350] sm:$0xff]
  %v124 = vld [vmem:[%s0 + $0x358] sm:$0xff]
  %v125 = vld [vmem:[%s0 + $0x360] sm:$0xff]
  %v126 = vld [vmem:[%s0 + $0x368] sm:$0xff]
  %v127 = vld [vmem:[%s0 + $0x370] sm:$0xff]
  %v128 = vld [vmem:[%s0 + $0x378] sm:$0xff]
  %v129 = vld [vmem:[%s0 + $0x380] sm:$0xff]
  %v130 = vld [vmem:[%s0 + $0x388] sm:$0xff]
  %v131 = vld [vmem:[%s0 + $0x390] sm:$0xff]
  %v132 = vld [vmem:[%s0 + $0x398] sm:$0xff]
  %v133 = vld [vmem:[%s0 + $0x3a0] sm:$0xff]
  %v134 = vld [vmem:[%s0 + $0x3a8] sm:$0xff]
  %v135 = vld [vmem:[%s0 + $0x3b0] sm:$0xff]
  %v136 = vld [vmem:[%s0 + $0x3b8] sm:$0xff]
  %v137 = vld [vmem:[%s0 + $0x3c0] sm:$0xff]
  %v138 = vld [vmem:[%s0 + $0x3c8] sm:$0xff]
  %v139 = vld [vmem:[%s0 + $0x3d0] sm:$0xff]
  %v140 = vld [vmem:[%s0 + $0x3d8] sm:$0xff]
  %v141 = vld [vmem:[%s0 + $0x3e0] sm:$0xff]
  %v142 = vld [vmem:[%s0 + $0x3e8] sm:$0xff]
  %v143 = vld [vmem:[%s0 + $0x3f0] sm:$0xff]
  %v144 = vld [vmem:[%s0 + $0x3f8] sm:$0xff]
  %v145 = vld [vmem:[%s1] sm:$0xff]
  %v146 = vld [vmem:[%s1 + $0x8] sm:$0xff]
  %v147 = vld [vmem:[%s1 + $0x10] sm:$0xff]
  %v148 = vld [vmem:[%s1 + $0x18] sm:$0xff]
  %v149 = vld [vmem:[%s1 + $0x20] sm:$0xff]
  %v150 = vld [vmem:[%s1 + $0x28] sm:$0xff]
  %v151 = vld [vmem:[%s1 + $0x30] sm:$0xff]
  %v152 = vld [vmem:[%s1 + $0x38] sm:$0xff]
  %v153 = vld [vmem:[%s2] sm:$0x1]
  %v155 = vperm.slane %v153, 0
  %vm157 = vcmask 523264
  %v159 = vsel %vm157, %v17, 0
  %v162 = vsel %vm157, %v18, 0
  %v165 = vsel %vm157, %v19, 0
  %v168 = vsel %vm157, %v20, 0
  %v171 = vsel %vm157, %v21, 0
  %v174 = vsel %vm157, %v22, 0
  %v177 = vsel %vm157, %v23, 0
  %v180 = vsel %vm157, %v24, 0
  %v183 = vsel %vm157, %v25, 0
  %v186 = vsel %vm157, %v26, 0
  %v189 = vsel %vm157, %v27, 0
  %v192 = vsel %vm157, %v28, 0
  %v195 = vsel %vm157, %v29, 0
  %v198 = vsel %vm157, %v30, 0
  %v201 = vsel %vm157, %v31, 0
  %v204 = vsel %vm157, %v32, 0
  %v207 = vsel %vm157, %v33, 0
  %v210 = vsel %vm157, %v34, 0
  %v213 = vsel %vm157, %v35, 0
  %v216 = vsel %vm157, %v36, 0
  %v219 = vsel %vm157, %v37, 0
  %v222 = vsel %vm157, %v38, 0
  %v225 = vsel %vm157, %v39, 0
  %v228 = vsel %vm157, %v40, 0
  %v231 = vsel %vm157, %v41, 0
  %v234 = vsel %vm157, %v42, 0
  %v237 = vsel %vm157, %v43, 0
  %v240 = vsel %vm157, %v44, 0
  %v243 = vsel %vm157, %v45, 0
  %v246 = vsel %vm157, %v46, 0
  %v249 = vsel %vm157, %v47, 0
  %v252 = vsel %vm157, %v48, 0
  %v255 = vsel %vm157, %v49, 0
  %v258 = vsel %vm157, %v50, 0
  %v261 = vsel %vm157, %v51, 0
  %v264 = vsel %vm157, %v52, 0
  %v267 = vsel %vm157, %v53, 0
  %v270 = vsel %vm157, %v54, 0
  %v273 = vsel %vm157, %v55, 0
  %v276 = vsel %vm157, %v56, 0
  %v279 = vsel %vm157, %v57, 0
  %v282 = vsel %vm157, %v58, 0
  %v285 = vsel %vm157, %v59, 0
  %v288 = vsel %vm157, %v60, 0
  %v291 = vsel %vm157, %v61, 0
  %v294 = vsel %vm157, %v62, 0
  %v297 = vsel %vm157, %v63, 0
  %v300 = vsel %vm157, %v64, 0
  %v303 = vsel %vm157, %v65, 0
  %v306 = vsel %vm157, %v66, 0
  %v309 = vsel %vm157, %v67, 0
  %v312 = vsel %vm157, %v68, 0
  %v315 = vsel %vm157, %v69, 0
  %v318 = vsel %vm157, %v70, 0
  %v321 = vsel %vm157, %v71, 0
  %v324 = vsel %vm157, %v72, 0
  %v327 = vsel %vm157, %v73, 0
  %v330 = vsel %vm157, %v74, 0
  %v333 = vsel %vm157, %v75, 0
  %v336 = vsel %vm157, %v76, 0
  %v339 = vsel %vm157, %v77, 0
  %v342 = vsel %vm157, %v78, 0
  %v345 = vsel %vm157, %v79, 0
  %v348 = vsel %vm157, %v80, 0
  %v351 = vsel %vm157, %v81, 0
  %v354 = vsel %vm157, %v82, 0
  %v357 = vsel %vm157, %v83, 0
  %v360 = vsel %vm157, %v84, 0
  %v363 = vsel %vm157, %v85, 0
  %v366 = vsel %vm157, %v86, 0
  %v369 = vsel %vm157, %v87, 0
  %v372 = vsel %vm157, %v88, 0
  %v375 = vsel %vm157, %v89, 0
  %v378 = vsel %vm157, %v90, 0
  %v381 = vsel %vm157, %v91, 0
  %v384 = vsel %vm157, %v92, 0
  %v387 = vsel %vm157, %v93, 0
  %v390 = vsel %vm157, %v94, 0
  %v393 = vsel %vm157, %v95, 0
  %v396 = vsel %vm157, %v96, 0
  %v399 = vsel %vm157, %v97, 0
  %v402 = vsel %vm157, %v98, 0
  %v405 = vsel %vm157, %v99, 0
  %v408 = vsel %vm157, %v100, 0
  %v411 = vsel %vm157, %v101, 0
  %v414 = vsel %vm157, %v102, 0
  %v417 = vsel %vm157, %v103, 0
  %v420 = vsel %vm157, %v104, 0
  %v423 = vsel %vm157, %v105, 0
  %v426 = vsel %vm157, %v106, 0
  %v429 = vsel %vm157, %v107, 0
  %v432 = vsel %vm157, %v108, 0
  %v435 = vsel %vm157, %v109, 0
  %v438 = vsel %vm157, %v110, 0
  %v441 = vsel %vm157, %v111, 0
  %v444 = vsel %vm157, %v112, 0
  %v447 = vsel %vm157, %v113, 0
  %v450 = vsel %vm157, %v114, 0
  %v453 = vsel %vm157, %v115, 0
  %v456 = vsel %vm157, %v116, 0
  %v459 = vsel %vm157, %v117, 0
  %v462 = vsel %vm157, %v118, 0
  %v465 = vsel %vm157, %v119, 0
  %v468 = vsel %vm157, %v120, 0
  %v471 = vsel %vm157, %v121, 0
  %v474 = vsel %vm157, %v122, 0
  %v477 = vsel %vm157, %v123, 0
  %v480 = vsel %vm157, %v124, 0
  %v483 = vsel %vm157, %v125, 0
  %v486 = vsel %vm157, %v126, 0
  %v489 = vsel %vm157, %v127, 0
  %v492 = vsel %vm157, %v128, 0
  %v495 = vsel %vm157, %v129, 0
  %v498 = vsel %vm157, %v130, 0
  %v501 = vsel %vm157, %v131, 0
  %v504 = vsel %vm157, %v132, 0
  %v507 = vsel %vm157, %v133, 0
  %v510 = vsel %vm157, %v134, 0
  %v513 = vsel %vm157, %v135, 0
  %v516 = vsel %vm157, %v136, 0
  %v519 = vsel %vm157, %v137, 0
  %v522 = vsel %vm157, %v138, 0
  %v525 = vsel %vm157, %v139, 0
  %v528 = vsel %vm157, %v140, 0
  %v531 = vsel %vm157, %v141, 0
  %v534 = vsel %vm157, %v142, 0
  %v537 = vsel %vm157, %v143, 0
  %v540 = vsel %vm157, %v144, 0
  %542 = vmatpush.msra.mxu0 0.0
  %543 = vmatpush.msra.mxu0 0.0
  %544 = vmatpush.msra.mxu0 0.0
  %545 = vmatpush.msra.mxu0 0.0
  %546 = vmatpush.msra.mxu0 0.0
  %547 = vmatpush.msra.mxu0 0.0
  %548 = vmatpush.msra.mxu0 0.0
  %549 = vmatpush.msra.mxu0 0.0
  %550 = vmatpush.msra.mxu0 %v152
  %551 = vmatpush.msra.mxu0 %v151
  %552 = vmatpush.msra.mxu0 %v150
  %553 = vmatpush.msra.mxu0 %v149
  %554 = vmatpush.msra.mxu0 %v148
  %555 = vmatpush.msra.mxu0 %v147
  %556 = vmatpush.msra.mxu0 %v146
  %557 = vmatpush.msra.mxu0 %v145
  %558 = vmatmul.f32.gmra.mxu0 %v159
  %v559 = vpop.f32.mrf.mxu0
  %v560 = vadd.f32 %v155, %v559
  %561 = vmatmul.f32.gmra.mxu0 %v162
  %v562 = vpop.f32.mrf.mxu0
  %v563 = vadd.f32 %v155, %v562
  %564 = vmatmul.f32.gmra.mxu0 %v165
  %v565 = vpop.f32.mrf.mxu0
  %v566 = vadd.f32 %v155, %v565
  %567 = vmatmul.f32.gmra.mxu0 %v168
  %v568 = vpop.f32.mrf.mxu0
  %v569 = vadd.f32 %v155, %v568
  %570 = vmatmul.f32.gmra.mxu0 %v171
  %v571 = vpop.f32.mrf.mxu0
  %v572 = vadd.f32 %v155, %v571
  %573 = vmatmul.f32.gmra.mxu0 %v174
  %v574 = vpop.f32.mrf.mxu0
  %v575 = vadd.f32 %v155, %v574
  %576 = vmatmul.f32.gmra.mxu0 %v177
  %v577 = vpop.f32.mrf.mxu0
  %v578 = vadd.f32 %v155, %v577
  %579 = vmatmul.f32.gmra.mxu0 %v180
  %v580 = vpop.f32.mrf.mxu0
  %v581 = vadd.f32 %v155, %v580
  %582 = vmatmul.f32.gmra.mxu0 %v183
  %v583 = vpop.f32.mrf.mxu0
  %v584 = vadd.f32 %v155, %v583
  %585 = vmatmul.f32.gmra.mxu0 %v186
  %v586 = vpop.f32.mrf.mxu0
  %v587 = vadd.f32 %v155, %v586
  %588 = vmatmul.f32.gmra.mxu0 %v189
  %v589 = vpop.f32.mrf.mxu0
  %v590 = vadd.f32 %v155, %v589
  %591 = vmatmul.f32.gmra.mxu0 %v192
  %v592 = vpop.f32.mrf.mxu0
  %v593 = vadd.f32 %v155, %v592
  %594 = vmatmul.f32.gmra.mxu0 %v195
  %v595 = vpop.f32.mrf.mxu0
  %v596 = vadd.f32 %v155, %v595
  %597 = vmatmul.f32.gmra.mxu0 %v198
  %v598 = vpop.f32.mrf.mxu0
  %v599 = vadd.f32 %v155, %v598
  %600 = vmatmul.f32.gmra.mxu0 %v201
  %v601 = vpop.f32.mrf.mxu0
  %v602 = vadd.f32 %v155, %v601
  %603 = vmatmul.f32.gmra.mxu0 %v204
  %v604 = vpop.f32.mrf.mxu0
  %v605 = vadd.f32 %v155, %v604
  %606 = vmatmul.f32.gmra.mxu0 %v207
  %v607 = vpop.f32.mrf.mxu0
  %v608 = vadd.f32 %v155, %v607
  %609 = vmatmul.f32.gmra.mxu0 %v210
  %v610 = vpop.f32.mrf.mxu0
  %v611 = vadd.f32 %v155, %v610
  %612 = vmatmul.f32.gmra.mxu0 %v213
  %v613 = vpop.f32.mrf.mxu0
  %v614 = vadd.f32 %v155, %v613
  %615 = vmatmul.f32.gmra.mxu0 %v216
  %v616 = vpop.f32.mrf.mxu0
  %v617 = vadd.f32 %v155, %v616
  %618 = vmatmul.f32.gmra.mxu0 %v219
  %v619 = vpop.f32.mrf.mxu0
  %v620 = vadd.f32 %v155, %v619
  %621 = vmatmul.f32.gmra.mxu0 %v222
  %v622 = vpop.f32.mrf.mxu0
  %v623 = vadd.f32 %v155, %v622
  %624 = vmatmul.f32.gmra.mxu0 %v225
  %v625 = vpop.f32.mrf.mxu0
  %v626 = vadd.f32 %v155, %v625
  %627 = vmatmul.f32.gmra.mxu0 %v228
  %v628 = vpop.f32.mrf.mxu0
  %v629 = vadd.f32 %v155, %v628
  %630 = vmatmul.f32.gmra.mxu0 %v231
  %v631 = vpop.f32.mrf.mxu0
  %v632 = vadd.f32 %v155, %v631
  %633 = vmatmul.f32.gmra.mxu0 %v234
  %v634 = vpop.f32.mrf.mxu0
  %v635 = vadd.f32 %v155, %v634
  %636 = vmatmul.f32.gmra.mxu0 %v237
  %v637 = vpop.f32.mrf.mxu0
  %v638 = vadd.f32 %v155, %v637
  %639 = vmatmul.f32.gmra.mxu0 %v240
  %v640 = vpop.f32.mrf.mxu0
  %v641 = vadd.f32 %v155, %v640
  %642 = vmatmul.f32.gmra.mxu0 %v243
  %v643 = vpop.f32.mrf.mxu0
  %v644 = vadd.f32 %v155, %v643
  %645 = vmatmul.f32.gmra.mxu0 %v246
  %v646 = vpop.f32.mrf.mxu0
  %v647 = vadd.f32 %v155, %v646
  %648 = vmatmul.f32.gmra.mxu0 %v249
  %v649 = vpop.f32.mrf.mxu0
  %v650 = vadd.f32 %v155, %v649
  %651 = vmatmul.f32.gmra.mxu0 %v252
  %v652 = vpop.f32.mrf.mxu0
  %v653 = vadd.f32 %v155, %v652
  %654 = vmatmul.f32.gmra.mxu0 %v255
  %v655 = vpop.f32.mrf.mxu0
  %v656 = vadd.f32 %v155, %v655
  %657 = vmatmul.f32.gmra.mxu0 %v258
  %v658 = vpop.f32.mrf.mxu0
  %v659 = vadd.f32 %v155, %v658
  %660 = vmatmul.f32.gmra.mxu0 %v261
  %v661 = vpop.f32.mrf.mxu0
  %v662 = vadd.f32 %v155, %v661
  %663 = vmatmul.f32.gmra.mxu0 %v264
  %v664 = vpop.f32.mrf.mxu0
  %v665 = vadd.f32 %v155, %v664
  %666 = vmatmul.f32.gmra.mxu0 %v267
  %v667 = vpop.f32.mrf.mxu0
  %v668 = vadd.f32 %v155, %v667
  %669 = vmatmul.f32.gmra.mxu0 %v270
  %v670 = vpop.f32.mrf.mxu0
  %v671 = vadd.f32 %v155, %v670
  %672 = vmatmul.f32.gmra.mxu0 %v273
  %v673 = vpop.f32.mrf.mxu0
  %v674 = vadd.f32 %v155, %v673
  %675 = vmatmul.f32.gmra.mxu0 %v276
  %v676 = vpop.f32.mrf.mxu0
  %v677 = vadd.f32 %v155, %v676
  %678 = vmatmul.f32.gmra.mxu0 %v279
  %v679 = vpop.f32.mrf.mxu0
  %v680 = vadd.f32 %v155, %v679
  %681 = vmatmul.f32.gmra.mxu0 %v282
  %v682 = vpop.f32.mrf.mxu0
  %v683 = vadd.f32 %v155, %v682
  %684 = vmatmul.f32.gmra.mxu0 %v285
  %v685 = vpop.f32.mrf.mxu0
  %v686 = vadd.f32 %v155, %v685
  %687 = vmatmul.f32.gmra.mxu0 %v288
  %v688 = vpop.f32.mrf.mxu0
  %v689 = vadd.f32 %v155, %v688
  %690 = vmatmul.f32.gmra.mxu0 %v291
  %v691 = vpop.f32.mrf.mxu0
  %v692 = vadd.f32 %v155, %v691
  %693 = vmatmul.f32.gmra.mxu0 %v294
  %v694 = vpop.f32.mrf.mxu0
  %v695 = vadd.f32 %v155, %v694
  %696 = vmatmul.f32.gmra.mxu0 %v297
  %v697 = vpop.f32.mrf.mxu0
  %v698 = vadd.f32 %v155, %v697
  %699 = vmatmul.f32.gmra.mxu0 %v300
  %v700 = vpop.f32.mrf.mxu0
  %v701 = vadd.f32 %v155, %v700
  %702 = vmatmul.f32.gmra.mxu0 %v303
  %v703 = vpop.f32.mrf.mxu0
  %v704 = vadd.f32 %v155, %v703
  %705 = vmatmul.f32.gmra.mxu0 %v306
  %v706 = vpop.f32.mrf.mxu0
  %v707 = vadd.f32 %v155, %v706
  %708 = vmatmul.f32.gmra.mxu0 %v309
  %v709 = vpop.f32.mrf.mxu0
  %v710 = vadd.f32 %v155, %v709
  %711 = vmatmul.f32.gmra.mxu0 %v312
  %v712 = vpop.f32.mrf.mxu0
  %v713 = vadd.f32 %v155, %v712
  %714 = vmatmul.f32.gmra.mxu0 %v315
  %v715 = vpop.f32.mrf.mxu0
  %v716 = vadd.f32 %v155, %v715
  %717 = vmatmul.f32.gmra.mxu0 %v318
  %v718 = vpop.f32.mrf.mxu0
  %v719 = vadd.f32 %v155, %v718
  %720 = vmatmul.f32.gmra.mxu0 %v321
  %v721 = vpop.f32.mrf.mxu0
  %v722 = vadd.f32 %v155, %v721
  %723 = vmatmul.f32.gmra.mxu0 %v324
  %v724 = vpop.f32.mrf.mxu0
  %v725 = vadd.f32 %v155, %v724
  %726 = vmatmul.f32.gmra.mxu0 %v327
  %v727 = vpop.f32.mrf.mxu0
  %v728 = vadd.f32 %v155, %v727
  %729 = vmatmul.f32.gmra.mxu0 %v330
  %v730 = vpop.f32.mrf.mxu0
  %v731 = vadd.f32 %v155, %v730
  %732 = vmatmul.f32.gmra.mxu0 %v333
  %v733 = vpop.f32.mrf.mxu0
  %v734 = vadd.f32 %v155, %v733
  %735 = vmatmul.f32.gmra.mxu0 %v336
  %v736 = vpop.f32.mrf.mxu0
  %v737 = vadd.f32 %v155, %v736
  %738 = vmatmul.f32.gmra.mxu0 %v339
  %v739 = vpop.f32.mrf.mxu0
  %v740 = vadd.f32 %v155, %v739
  %741 = vmatmul.f32.gmra.mxu0 %v342
  %v742 = vpop.f32.mrf.mxu0
  %v743 = vadd.f32 %v155, %v742
  %744 = vmatmul.f32.gmra.mxu0 %v345
  %v745 = vpop.f32.mrf.mxu0
  %v746 = vadd.f32 %v155, %v745
  %747 = vmatmul.f32.gmra.mxu0 %v348
  %v748 = vpop.f32.mrf.mxu0
  %v749 = vadd.f32 %v155, %v748
  %750 = vmatmul.f32.gmra.mxu0 %v351
  %v751 = vpop.f32.mrf.mxu0
  %v752 = vadd.f32 %v155, %v751
  %753 = vmatmul.f32.gmra.mxu0 %v354
  %v754 = vpop.f32.mrf.mxu0
  %v755 = vadd.f32 %v155, %v754
  %756 = vmatmul.f32.gmra.mxu0 %v357
  %v757 = vpop.f32.mrf.mxu0
  %v758 = vadd.f32 %v155, %v757
  %759 = vmatmul.f32.gmra.mxu0 %v360
  %v760 = vpop.f32.mrf.mxu0
  %v761 = vadd.f32 %v155, %v760
  %762 = vmatmul.f32.gmra.mxu0 %v363
  %v763 = vpop.f32.mrf.mxu0
  %v764 = vadd.f32 %v155, %v763
  %765 = vmatmul.f32.gmra.mxu0 %v366
  %v766 = vpop.f32.mrf.mxu0
  %v767 = vadd.f32 %v155, %v766
  %768 = vmatmul.f32.gmra.mxu0 %v369
  %v769 = vpop.f32.mrf.mxu0
  %v770 = vadd.f32 %v155, %v769
  %771 = vmatmul.f32.gmra.mxu0 %v372
  %v772 = vpop.f32.mrf.mxu0
  %v773 = vadd.f32 %v155, %v772
  %774 = vmatmul.f32.gmra.mxu0 %v375
  %v775 = vpop.f32.mrf.mxu0
  %v776 = vadd.f32 %v155, %v775
  %777 = vmatmul.f32.gmra.mxu0 %v378
  %v778 = vpop.f32.mrf.mxu0
  %v779 = vadd.f32 %v155, %v778
  %780 = vmatmul.f32.gmra.mxu0 %v381
  %v781 = vpop.f32.mrf.mxu0
  %v782 = vadd.f32 %v155, %v781
  %783 = vmatmul.f32.gmra.mxu0 %v384
  %v784 = vpop.f32.mrf.mxu0
  %v785 = vadd.f32 %v155, %v784
  %786 = vmatmul.f32.gmra.mxu0 %v387
  %v787 = vpop.f32.mrf.mxu0
  %v788 = vadd.f32 %v155, %v787
  %789 = vmatmul.f32.gmra.mxu0 %v390
  %v790 = vpop.f32.mrf.mxu0
  %v791 = vadd.f32 %v155, %v790
  %792 = vmatmul.f32.gmra.mxu0 %v393
  %v793 = vpop.f32.mrf.mxu0
  %v794 = vadd.f32 %v155, %v793
  %795 = vmatmul.f32.gmra.mxu0 %v396
  %v796 = vpop.f32.mrf.mxu0
  %v797 = vadd.f32 %v155, %v796
  %798 = vmatmul.f32.gmra.mxu0 %v399
  %v799 = vpop.f32.mrf.mxu0
  %v800 = vadd.f32 %v155, %v799
  %801 = vmatmul.f32.gmra.mxu0 %v402
  %v802 = vpop.f32.mrf.mxu0
  %v803 = vadd.f32 %v155, %v802
  %804 = vmatmul.f32.gmra.mxu0 %v405
  %v805 = vpop.f32.mrf.mxu0
  %v806 = vadd.f32 %v155, %v805
  %807 = vmatmul.f32.gmra.mxu0 %v408
  %v808 = vpop.f32.mrf.mxu0
  %v809 = vadd.f32 %v155, %v808
  %810 = vmatmul.f32.gmra.mxu0 %v411
  %v811 = vpop.f32.mrf.mxu0
  %v812 = vadd.f32 %v155, %v811
  %813 = vmatmul.f32.gmra.mxu0 %v414
  %v814 = vpop.f32.mrf.mxu0
  %v815 = vadd.f32 %v155, %v814
  %816 = vmatmul.f32.gmra.mxu0 %v417
  %v817 = vpop.f32.mrf.mxu0
  %v818 = vadd.f32 %v155, %v817
  %819 = vmatmul.f32.gmra.mxu0 %v420
  %v820 = vpop.f32.mrf.mxu0
  %v821 = vadd.f32 %v155, %v820
  %822 = vmatmul.f32.gmra.mxu0 %v423
  %v823 = vpop.f32.mrf.mxu0
  %v824 = vadd.f32 %v155, %v823
  %825 = vmatmul.f32.gmra.mxu0 %v426
  %v826 = vpop.f32.mrf.mxu0
  %v827 = vadd.f32 %v155, %v826
  %828 = vmatmul.f32.gmra.mxu0 %v429
  %v829 = vpop.f32.mrf.mxu0
  %v830 = vadd.f32 %v155, %v829
  %831 = vmatmul.f32.gmra.mxu0 %v432
  %v832 = vpop.f32.mrf.mxu0
  %v833 = vadd.f32 %v155, %v832
  %834 = vmatmul.f32.gmra.mxu0 %v435
  %v835 = vpop.f32.mrf.mxu0
  %v836 = vadd.f32 %v155, %v835
  %837 = vmatmul.f32.gmra.mxu0 %v438
  %v838 = vpop.f32.mrf.mxu0
  %v839 = vadd.f32 %v155, %v838
  %840 = vmatmul.f32.gmra.mxu0 %v441
  %v841 = vpop.f32.mrf.mxu0
  %v842 = vadd.f32 %v155, %v841
  %843 = vmatmul.f32.gmra.mxu0 %v444
  %v844 = vpop.f32.mrf.mxu0
  %v845 = vadd.f32 %v155, %v844
  %846 = vmatmul.f32.gmra.mxu0 %v447
  %v847 = vpop.f32.mrf.mxu0
  %v848 = vadd.f32 %v155, %v847
  %849 = vmatmul.f32.gmra.mxu0 %v450
  %v850 = vpop.f32.mrf.mxu0
  %v851 = vadd.f32 %v155, %v850
  %852 = vmatmul.f32.gmra.mxu0 %v453
  %v853 = vpop.f32.mrf.mxu0
  %v854 = vadd.f32 %v155, %v853
  %855 = vmatmul.f32.gmra.mxu0 %v456
  %v856 = vpop.f32.mrf.mxu0
  %v857 = vadd.f32 %v155, %v856
  %858 = vmatmul.f32.gmra.mxu0 %v459
  %v859 = vpop.f32.mrf.mxu0
  %v860 = vadd.f32 %v155, %v859
  %861 = vmatmul.f32.gmra.mxu0 %v462
  %v862 = vpop.f32.mrf.mxu0
  %v863 = vadd.f32 %v155, %v862
  %864 = vmatmul.f32.gmra.mxu0 %v465
  %v865 = vpop.f32.mrf.mxu0
  %v866 = vadd.f32 %v155, %v865
  %867 = vmatmul.f32.gmra.mxu0 %v468
  %v868 = vpop.f32.mrf.mxu0
  %v869 = vadd.f32 %v155, %v868
  %870 = vmatmul.f32.gmra.mxu0 %v471
  %v871 = vpop.f32.mrf.mxu0
  %v872 = vadd.f32 %v155, %v871
  %873 = vmatmul.f32.gmra.mxu0 %v474
  %v874 = vpop.f32.mrf.mxu0
  %v875 = vadd.f32 %v155, %v874
  %876 = vmatmul.f32.gmra.mxu0 %v477
  %v877 = vpop.f32.mrf.mxu0
  %v878 = vadd.f32 %v155, %v877
  %879 = vmatmul.f32.gmra.mxu0 %v480
  %v880 = vpop.f32.mrf.mxu0
  %v881 = vadd.f32 %v155, %v880
  %882 = vmatmul.f32.gmra.mxu0 %v483
  %v883 = vpop.f32.mrf.mxu0
  %v884 = vadd.f32 %v155, %v883
  %885 = vmatmul.f32.gmra.mxu0 %v486
  %v886 = vpop.f32.mrf.mxu0
  %v887 = vadd.f32 %v155, %v886
  %888 = vmatmul.f32.gmra.mxu0 %v489
  %v889 = vpop.f32.mrf.mxu0
  %v890 = vadd.f32 %v155, %v889
  %891 = vmatmul.f32.gmra.mxu0 %v492
  %v892 = vpop.f32.mrf.mxu0
  %v893 = vadd.f32 %v155, %v892
  %894 = vmatmul.f32.gmra.mxu0 %v495
  %v895 = vpop.f32.mrf.mxu0
  %v896 = vadd.f32 %v155, %v895
  %897 = vmatmul.f32.gmra.mxu0 %v498
  %v898 = vpop.f32.mrf.mxu0
  %v899 = vadd.f32 %v155, %v898
  %900 = vmatmul.f32.gmra.mxu0 %v501
  %v901 = vpop.f32.mrf.mxu0
  %v902 = vadd.f32 %v155, %v901
  %903 = vmatmul.f32.gmra.mxu0 %v504
  %v904 = vpop.f32.mrf.mxu0
  %v905 = vadd.f32 %v155, %v904
  %906 = vmatmul.f32.gmra.mxu0 %v507
  %v907 = vpop.f32.mrf.mxu0
  %v908 = vadd.f32 %v155, %v907
  %909 = vmatmul.f32.gmra.mxu0 %v510
  %v910 = vpop.f32.mrf.mxu0
  %v911 = vadd.f32 %v155, %v910
  %912 = vmatmul.f32.gmra.mxu0 %v513
  %v913 = vpop.f32.mrf.mxu0
  %v914 = vadd.f32 %v155, %v913
  %915 = vmatmul.f32.gmra.mxu0 %v516
  %v916 = vpop.f32.mrf.mxu0
  %v917 = vadd.f32 %v155, %v916
  %918 = vmatmul.f32.gmra.mxu0 %v519
  %v919 = vpop.f32.mrf.mxu0
  %v920 = vadd.f32 %v155, %v919
  %921 = vmatmul.f32.gmra.mxu0 %v522
  %v922 = vpop.f32.mrf.mxu0
  %v923 = vadd.f32 %v155, %v922
  %924 = vmatmul.f32.gmra.mxu0 %v525
  %v925 = vpop.f32.mrf.mxu0
  %v926 = vadd.f32 %v155, %v925
  %927 = vmatmul.f32.gmra.mxu0 %v528
  %v928 = vpop.f32.mrf.mxu0
  %v929 = vadd.f32 %v155, %v928
  %930 = vmatmul.f32.gmra.mxu0 %v531
  %v931 = vpop.f32.mrf.mxu0
  %v932 = vadd.f32 %v155, %v931
  %933 = vmatmul.f32.gmra.mxu0 %v534
  %v934 = vpop.f32.mrf.mxu0
  %v935 = vadd.f32 %v155, %v934
  %936 = vmatmul.f32.gmra.mxu0 %v537
  %v937 = vpop.f32.mrf.mxu0
  %v938 = vadd.f32 %v155, %v937
  %939 = vmatmul.f32.gmra.mxu0 %v540
  %v940 = vpop.f32.mrf.mxu0
  %v941 = vadd.f32 %v155, %v940
  %942 = vdwg.mxu0
  %vm943 = vcmp.gt.f32.partialorder %v560, 0.0
  %vm944 = vcmp.gt.f32.partialorder %v563, 0.0
  %vm945 = vcmp.gt.f32.partialorder %v566, 0.0
  %vm946 = vcmp.gt.f32.partialorder %v569, 0.0
  %vm947 = vcmp.gt.f32.partialorder %v572, 0.0
  %vm948 = vcmp.gt.f32.partialorder %v575, 0.0
  %vm949 = vcmp.gt.f32.partialorder %v578, 0.0
  %vm950 = vcmp.gt.f32.partialorder %v581, 0.0
  %vm951 = vcmp.gt.f32.partialorder %v584, 0.0
  %vm952 = vcmp.gt.f32.partialorder %v587, 0.0
  %vm953 = vcmp.gt.f32.partialorder %v590, 0.0
  %vm954 = vcmp.gt.f32.partialorder %v593, 0.0
  %vm955 = vcmp.gt.f32.partialorder %v596, 0.0
  %vm956 = vcmp.gt.f32.partialorder %v599, 0.0
  %vm957 = vcmp.gt.f32.partialorder %v602, 0.0
  %vm958 = vcmp.gt.f32.partialorder %v605, 0.0
  %vm959 = vcmp.gt.f32.partialorder %v608, 0.0
  %vm960 = vcmp.gt.f32.partialorder %v611, 0.0
  %vm961 = vcmp.gt.f32.partialorder %v614, 0.0
  %vm962 = vcmp.gt.f32.partialorder %v617, 0.0
  %vm963 = vcmp.gt.f32.partialorder %v620, 0.0
  %vm964 = vcmp.gt.f32.partialorder %v623, 0.0
  %vm965 = vcmp.gt.f32.partialorder %v626, 0.0
  %vm966 = vcmp.gt.f32.partialorder %v629, 0.0
  %vm967 = vcmp.gt.f32.partialorder %v632, 0.0
  %vm968 = vcmp.gt.f32.partialorder %v635, 0.0
  %vm969 = vcmp.gt.f32.partialorder %v638, 0.0
  %vm970 = vcmp.gt.f32.partialorder %v641, 0.0
  %vm971 = vcmp.gt.f32.partialorder %v644, 0.0
  %vm972 = vcmp.gt.f32.partialorder %v647, 0.0
  %vm973 = vcmp.gt.f32.partialorder %v650, 0.0
  %vm974 = vcmp.gt.f32.partialorder %v653, 0.0
  %vm975 = vcmp.gt.f32.partialorder %v656, 0.0
  %vm976 = vcmp.gt.f32.partialorder %v659, 0.0
  %vm977 = vcmp.gt.f32.partialorder %v662, 0.0
  %vm978 = vcmp.gt.f32.partialorder %v665, 0.0
  %vm979 = vcmp.gt.f32.partialorder %v668, 0.0
  %vm980 = vcmp.gt.f32.partialorder %v671, 0.0
  %vm981 = vcmp.gt.f32.partialorder %v674, 0.0
  %vm982 = vcmp.gt.f32.partialorder %v677, 0.0
  %vm983 = vcmp.gt.f32.partialorder %v680, 0.0
  %vm984 = vcmp.gt.f32.partialorder %v683, 0.0
  %vm985 = vcmp.gt.f32.partialorder %v686, 0.0
  %vm986 = vcmp.gt.f32.partialorder %v689, 0.0
  %vm987 = vcmp.gt.f32.partialorder %v692, 0.0
  %vm988 = vcmp.gt.f32.partialorder %v695, 0.0
  %vm989 = vcmp.gt.f32.partialorder %v698, 0.0
  %vm990 = vcmp.gt.f32.partialorder %v701, 0.0
  %vm991 = vcmp.gt.f32.partialorder %v704, 0.0
  %vm992 = vcmp.gt.f32.partialorder %v707, 0.0
  %vm993 = vcmp.gt.f32.partialorder %v710, 0.0
  %vm994 = vcmp.gt.f32.partialorder %v713, 0.0
  %vm995 = vcmp.gt.f32.partialorder %v716, 0.0
  %vm996 = vcmp.gt.f32.partialorder %v719, 0.0
  %vm997 = vcmp.gt.f32.partialorder %v722, 0.0
  %vm998 = vcmp.gt.f32.partialorder %v725, 0.0
  %vm999 = vcmp.gt.f32.partialorder %v728, 0.0
  %vm1000 = vcmp.gt.f32.partialorder %v731, 0.0
  %vm1001 = vcmp.gt.f32.partialorder %v734, 0.0
  %vm1002 = vcmp.gt.f32.partialorder %v737, 0.0
  %vm1003 = vcmp.gt.f32.partialorder %v740, 0.0
  %vm1004 = vcmp.gt.f32.partialorder %v743, 0.0
  %vm1005 = vcmp.gt.f32.partialorder %v746, 0.0
  %vm1006 = vcmp.gt.f32.partialorder %v749, 0.0
  %vm1007 = vcmp.gt.f32.partialorder %v752, 0.0
  %vm1008 = vcmp.gt.f32.partialorder %v755, 0.0
  %vm1009 = vcmp.gt.f32.partialorder %v758, 0.0
  %vm1010 = vcmp.gt.f32.partialorder %v761, 0.0
  %vm1011 = vcmp.gt.f32.partialorder %v764, 0.0
  %vm1012 = vcmp.gt.f32.partialorder %v767, 0.0
  %vm1013 = vcmp.gt.f32.partialorder %v770, 0.0
  %vm1014 = vcmp.gt.f32.partialorder %v773, 0.0
  %vm1015 = vcmp.gt.f32.partialorder %v776, 0.0
  %vm1016 = vcmp.gt.f32.partialorder %v779, 0.0
  %vm1017 = vcmp.gt.f32.partialorder %v782, 0.0
  %vm1018 = vcmp.gt.f32.partialorder %v785, 0.0
  %vm1019 = vcmp.gt.f32.partialorder %v788, 0.0
  %vm1020 = vcmp.gt.f32.partialorder %v791, 0.0
  %vm1021 = vcmp.gt.f32.partialorder %v794, 0.0
  %vm1022 = vcmp.gt.f32.partialorder %v797, 0.0
  %vm1023 = vcmp.gt.f32.partialorder %v800, 0.0
  %vm1024 = vcmp.gt.f32.partialorder %v803, 0.0
  %vm1025 = vcmp.gt.f32.partialorder %v806, 0.0
  %vm1026 = vcmp.gt.f32.partialorder %v809, 0.0
  %vm1027 = vcmp.gt.f32.partialorder %v812, 0.0
  %vm1028 = vcmp.gt.f32.partialorder %v815, 0.0
  %vm1029 = vcmp.gt.f32.partialorder %v818, 0.0
  %vm1030 = vcmp.gt.f32.partialorder %v821, 0.0
  %vm1031 = vcmp.gt.f32.partialorder %v824, 0.0
  %vm1032 = vcmp.gt.f32.partialorder %v827, 0.0
  %vm1033 = vcmp.gt.f32.partialorder %v830, 0.0
  %vm1034 = vcmp.gt.f32.partialorder %v833, 0.0
  %vm1035 = vcmp.gt.f32.partialorder %v836, 0.0
  %vm1036 = vcmp.gt.f32.partialorder %v839, 0.0
  %vm1037 = vcmp.gt.f32.partialorder %v842, 0.0
  %vm1038 = vcmp.gt.f32.partialorder %v845, 0.0
  %vm1039 = vcmp.gt.f32.partialorder %v848, 0.0
  %vm1040 = vcmp.gt.f32.partialorder %v851, 0.0
  %vm1041 = vcmp.gt.f32.partialorder %v854, 0.0
  %vm1042 = vcmp.gt.f32.partialorder %v857, 0.0
  %vm1043 = vcmp.gt.f32.partialorder %v860, 0.0
  %vm1044 = vcmp.gt.f32.partialorder %v863, 0.0
  %vm1045 = vcmp.gt.f32.partialorder %v866, 0.0
  %vm1046 = vcmp.gt.f32.partialorder %v869, 0.0
  %vm1047 = vcmp.gt.f32.partialorder %v872, 0.0
  %vm1048 = vcmp.gt.f32.partialorder %v875, 0.0
  %vm1049 = vcmp.gt.f32.partialorder %v878, 0.0
  %vm1050 = vcmp.gt.f32.partialorder %v881, 0.0
  %vm1051 = vcmp.gt.f32.partialorder %v884, 0.0
  %vm1052 = vcmp.gt.f32.partialorder %v887, 0.0
  %vm1053 = vcmp.gt.f32.partialorder %v890, 0.0
  %vm1054 = vcmp.gt.f32.partialorder %v893, 0.0
  %vm1055 = vcmp.gt.f32.partialorder %v896, 0.0
  %vm1056 = vcmp.gt.f32.partialorder %v899, 0.0
  %vm1057 = vcmp.gt.f32.partialorder %v902, 0.0
  %vm1058 = vcmp.gt.f32.partialorder %v905, 0.0
  %vm1059 = vcmp.gt.f32.partialorder %v908, 0.0
  %vm1060 = vcmp.gt.f32.partialorder %v911, 0.0
  %vm1061 = vcmp.gt.f32.partialorder %v914, 0.0
  %vm1062 = vcmp.gt.f32.partialorder %v917, 0.0
  %vm1063 = vcmp.gt.f32.partialorder %v920, 0.0
  %vm1064 = vcmp.gt.f32.partialorder %v923, 0.0
  %vm1065 = vcmp.gt.f32.partialorder %v926, 0.0
  %vm1066 = vcmp.gt.f32.partialorder %v929, 0.0
  %vm1067 = vcmp.gt.f32.partialorder %v932, 0.0
  %vm1068 = vcmp.gt.f32.partialorder %v935, 0.0
  %vm1069 = vcmp.gt.f32.partialorder %v938, 0.0
  %vm1070 = vcmp.gt.f32.partialorder %v941, 0.0
  %v1071 = vld [vmem:[%s3] sm:$0x1]
  %v1073 = vperm.slane %v1071, 0
  %v1075 = vmul.f32 %v1073, %v560
  %v1076 = vmul.f32 %v1073, %v563
  %v1077 = vmul.f32 %v1073, %v566
  %v1078 = vmul.f32 %v1073, %v569
  %v1079 = vmul.f32 %v1073, %v572
  %v1080 = vmul.f32 %v1073, %v575
  %v1081 = vmul.f32 %v1073, %v578
  %v1082 = vmul.f32 %v1073, %v581
  %v1083 = vmul.f32 %v1073, %v584
  %v1084 = vmul.f32 %v1073, %v587
  %v1085 = vmul.f32 %v1073, %v590
  %v1086 = vmul.f32 %v1073, %v593
  %v1087 = vmul.f32 %v1073, %v596
  %v1088 = vmul.f32 %v1073, %v599
  %v1089 = vmul.f32 %v1073, %v602
  %v1090 = vmul.f32 %v1073, %v605
  %v1091 = vmul.f32 %v1073, %v608
  %v1092 = vmul.f32 %v1073, %v611
  %v1093 = vmul.f32 %v1073, %v614
  %v1094 = vmul.f32 %v1073, %v617
  %v1095 = vmul.f32 %v1073, %v620
  %v1096 = vmul.f32 %v1073, %v623
  %v1097 = vmul.f32 %v1073, %v626
  %v1098 = vmul.f32 %v1073, %v629
  %v1099 = vmul.f32 %v1073, %v632
  %v1100 = vmul.f32 %v1073, %v635
  %v1101 = vmul.f32 %v1073, %v638
  %v1102 = vmul.f32 %v1073, %v641
  %v1103 = vmul.f32 %v1073, %v644
  %v1104 = vmul.f32 %v1073, %v647
  %v1105 = vmul.f32 %v1073, %v650
  %v1106 = vmul.f32 %v1073, %v653
  %v1107 = vmul.f32 %v1073, %v656
  %v1108 = vmul.f32 %v1073, %v659
  %v1109 = vmul.f32 %v1073, %v662
  %v1110 = vmul.f32 %v1073, %v665
  %v1111 = vmul.f32 %v1073, %v668
  %v1112 = vmul.f32 %v1073, %v671
  %v1113 = vmul.f32 %v1073, %v674
  %v1114 = vmul.f32 %v1073, %v677
  %v1115 = vmul.f32 %v1073, %v680
  %v1116 = vmul.f32 %v1073, %v683
  %v1117 = vmul.f32 %v1073, %v686
  %v1118 = vmul.f32 %v1073, %v689
  %v1119 = vmul.f32 %v1073, %v692
  %v1120 = vmul.f32 %v1073, %v695
  %v1121 = vmul.f32 %v1073, %v698
  %v1122 = vmul.f32 %v1073, %v701
  %v1123 = vmul.f32 %v1073, %v704
  %v1124 = vmul.f32 %v1073, %v707
  %v1125 = vmul.f32 %v1073, %v710
  %v1126 = vmul.f32 %v1073, %v713
  %v1127 = vmul.f32 %v1073, %v716
  %v1128 = vmul.f32 %v1073, %v719
  %v1129 = vmul.f32 %v1073, %v722
  %v1130 = vmul.f32 %v1073, %v725
  %v1131 = vmul.f32 %v1073, %v728
  %v1132 = vmul.f32 %v1073, %v731
  %v1133 = vmul.f32 %v1073, %v734
  %v1134 = vmul.f32 %v1073, %v737
  %v1135 = vmul.f32 %v1073, %v740
  %v1136 = vmul.f32 %v1073, %v743
  %v1137 = vmul.f32 %v1073, %v746
  %v1138 = vmul.f32 %v1073, %v749
  %v1139 = vmul.f32 %v1073, %v752
  %v1140 = vmul.f32 %v1073, %v755
  %v1141 = vmul.f32 %v1073, %v758
  %v1142 = vmul.f32 %v1073, %v761
  %v1143 = vmul.f32 %v1073, %v764
  %v1144 = vmul.f32 %v1073, %v767
  %v1145 = vmul.f32 %v1073, %v770
  %v1146 = vmul.f32 %v1073, %v773
  %v1147 = vmul.f32 %v1073, %v776
  %v1148 = vmul.f32 %v1073, %v779
  %v1149 = vmul.f32 %v1073, %v782
  %v1150 = vmul.f32 %v1073, %v785
  %v1151 = vmul.f32 %v1073, %v788
  %v1152 = vmul.f32 %v1073, %v791
  %v1153 = vmul.f32 %v1073, %v794
  %v1154 = vmul.f32 %v1073, %v797
  %v1155 = vmul.f32 %v1073, %v800
  %v1156 = vmul.f32 %v1073, %v803
  %v1157 = vmul.f32 %v1073, %v806
  %v1158 = vmul.f32 %v1073, %v809
  %v1159 = vmul.f32 %v1073, %v812
  %v1160 = vmul.f32 %v1073, %v815
  %v1161 = vmul.f32 %v1073, %v818
  %v1162 = vmul.f32 %v1073, %v821
  %v1163 = vmul.f32 %v1073, %v824
  %v1164 = vmul.f32 %v1073, %v827
  %v1165 = vmul.f32 %v1073, %v830
  %v1166 = vmul.f32 %v1073, %v833
  %v1167 = vmul.f32 %v1073, %v836
  %v1168 = vmul.f32 %v1073, %v839
  %v1169 = vmul.f32 %v1073, %v842
  %v1170 = vmul.f32 %v1073, %v845
  %v1171 = vmul.f32 %v1073, %v848
  %v1172 = vmul.f32 %v1073, %v851
  %v1173 = vmul.f32 %v1073, %v854
  %v1174 = vmul.f32 %v1073, %v857
  %v1175 = vmul.f32 %v1073, %v860
  %v1176 = vmul.f32 %v1073, %v863
  %v1177 = vmul.f32 %v1073, %v866
  %v1178 = vmul.f32 %v1073, %v869
  %v1179 = vmul.f32 %v1073, %v872
  %v1180 = vmul.f32 %v1073, %v875
  %v1181 = vmul.f32 %v1073, %v878
  %v1182 = vmul.f32 %v1073, %v881
  %v1183 = vmul.f32 %v1073, %v884
  %v1184 = vmul.f32 %v1073, %v887
  %v1185 = vmul.f32 %v1073, %v890
  %v1186 = vmul.f32 %v1073, %v893
  %v1187 = vmul.f32 %v1073, %v896
  %v1188 = vmul.f32 %v1073, %v899
  %v1189 = vmul.f32 %v1073, %v902
  %v1190 = vmul.f32 %v1073, %v905
  %v1191 = vmul.f32 %v1073, %v908
  %v1192 = vmul.f32 %v1073, %v911
  %v1193 = vmul.f32 %v1073, %v914
  %v1194 = vmul.f32 %v1073, %v917
  %v1195 = vmul.f32 %v1073, %v920
  %v1196 = vmul.f32 %v1073, %v923
  %v1197 = vmul.f32 %v1073, %v926
  %v1198 = vmul.f32 %v1073, %v929
  %v1199 = vmul.f32 %v1073, %v932
  %v1200 = vmul.f32 %v1073, %v935
  %v1201 = vmul.f32 %v1073, %v938
  %v1202 = vmul.f32 %v1073, %v941
  %v1203 = vsel %vm943, %v560, %v1075
  %v1204 = vsel %vm944, %v563, %v1076
  %v1205 = vsel %vm945, %v566, %v1077
  %v1206 = vsel %vm946, %v569, %v1078
  %v1207 = vsel %vm947, %v572, %v1079
  %v1208 = vsel %vm948, %v575, %v1080
  %v1209 = vsel %vm949, %v578, %v1081
  %v1210 = vsel %vm950, %v581, %v1082
  %v1211 = vsel %vm951, %v584, %v1083
  %v1212 = vsel %vm952, %v587, %v1084
  %v1213 = vsel %vm953, %v590, %v1085
  %v1214 = vsel %vm954, %v593, %v1086
  %v1215 = vsel %vm955, %v596, %v1087
  %v1216 = vsel %vm956, %v599, %v1088
  %v1217 = vsel %vm957, %v602, %v1089
  %v1218 = vsel %vm958, %v605, %v1090
  %v1219 = vsel %vm959, %v608, %v1091
  %v1220 = vsel %vm960, %v611, %v1092
  %v1221 = vsel %vm961, %v614, %v1093
  %v1222 = vsel %vm962, %v617, %v1094
  %v1223 = vsel %vm963, %v620, %v1095
  %v1224 = vsel %vm964, %v623, %v1096
  %v1225 = vsel %vm965, %v626, %v1097
  %v1226 = vsel %vm966, %v629, %v1098
  %v1227 = vsel %vm967, %v632, %v1099
  %v1228 = vsel %vm968, %v635, %v1100
  %v1229 = vsel %vm969, %v638, %v1101
  %v1230 = vsel %vm970, %v641, %v1102
  %v1231 = vsel %vm971, %v644, %v1103
  %v1232 = vsel %vm972, %v647, %v1104
  %v1233 = vsel %vm973, %v650, %v1105
  %v1234 = vsel %vm974, %v653, %v1106
  %v1235 = vsel %vm975, %v656, %v1107
  %v1236 = vsel %vm976, %v659, %v1108
  %v1237 = vsel %vm977, %v662, %v1109
  %v1238 = vsel %vm978, %v665, %v1110
  %v1239 = vsel %vm979, %v668, %v1111
  %v1240 = vsel %vm980, %v671, %v1112
  %v1241 = vsel %vm981, %v674, %v1113
  %v1242 = vsel %vm982, %v677, %v1114
  %v1243 = vsel %vm983, %v680, %v1115
  %v1244 = vsel %vm984, %v683, %v1116
  %v1245 = vsel %vm985, %v686, %v1117
  %v1246 = vsel %vm986, %v689, %v1118
  %v1247 = vsel %vm987, %v692, %v1119
  %v1248 = vsel %vm988, %v695, %v1120
  %v1249 = vsel %vm989, %v698, %v1121
  %v1250 = vsel %vm990, %v701, %v1122
  %v1251 = vsel %vm991, %v704, %v1123
  %v1252 = vsel %vm992, %v707, %v1124
  %v1253 = vsel %vm993, %v710, %v1125
  %v1254 = vsel %vm994, %v713, %v1126
  %v1255 = vsel %vm995, %v716, %v1127
  %v1256 = vsel %vm996, %v719, %v1128
  %v1257 = vsel %vm997, %v722, %v1129
  %v1258 = vsel %vm998, %v725, %v1130
  %v1259 = vsel %vm999, %v728, %v1131
  %v1260 = vsel %vm1000, %v731, %v1132
  %v1261 = vsel %vm1001, %v734, %v1133
  %v1262 = vsel %vm1002, %v737, %v1134
  %v1263 = vsel %vm1003, %v740, %v1135
  %v1264 = vsel %vm1004, %v743, %v1136
  %v1265 = vsel %vm1005, %v746, %v1137
  %v1266 = vsel %vm1006, %v749, %v1138
  %v1267 = vsel %vm1007, %v752, %v1139
  %v1268 = vsel %vm1008, %v755, %v1140
  %v1269 = vsel %vm1009, %v758, %v1141
  %v1270 = vsel %vm1010, %v761, %v1142
  %v1271 = vsel %vm1011, %v764, %v1143
  %v1272 = vsel %vm1012, %v767, %v1144
  %v1273 = vsel %vm1013, %v770, %v1145
  %v1274 = vsel %vm1014, %v773, %v1146
  %v1275 = vsel %vm1015, %v776, %v1147
  %v1276 = vsel %vm1016, %v779, %v1148
  %v1277 = vsel %vm1017, %v782, %v1149
  %v1278 = vsel %vm1018, %v785, %v1150
  %v1279 = vsel %vm1019, %v788, %v1151
  %v1280 = vsel %vm1020, %v791, %v1152
  %v1281 = vsel %vm1021, %v794, %v1153
  %v1282 = vsel %vm1022, %v797, %v1154
  %v1283 = vsel %vm1023, %v800, %v1155
  %v1284 = vsel %vm1024, %v803, %v1156
  %v1285 = vsel %vm1025, %v806, %v1157
  %v1286 = vsel %vm1026, %v809, %v1158
  %v1287 = vsel %vm1027, %v812, %v1159
  %v1288 = vsel %vm1028, %v815, %v1160
  %v1289 = vsel %vm1029, %v818, %v1161
  %v1290 = vsel %vm1030, %v821, %v1162
  %v1291 = vsel %vm1031, %v824, %v1163
  %v1292 = vsel %vm1032, %v827, %v1164
  %v1293 = vsel %vm1033, %v830, %v1165
  %v1294 = vsel %vm1034, %v833, %v1166
  %v1295 = vsel %vm1035, %v836, %v1167
  %v1296 = vsel %vm1036, %v839, %v1168
  %v1297 = vsel %vm1037, %v842, %v1169
  %v1298 = vsel %vm1038, %v845, %v1170
  %v1299 = vsel %vm1039, %v848, %v1171
  %v1300 = vsel %vm1040, %v851, %v1172
  %v1301 = vsel %vm1041, %v854, %v1173
  %v1302 = vsel %vm1042, %v857, %v1174
  %v1303 = vsel %vm1043, %v860, %v1175
  %v1304 = vsel %vm1044, %v863, %v1176
  %v1305 = vsel %vm1045, %v866, %v1177
  %v1306 = vsel %vm1046, %v869, %v1178
  %v1307 = vsel %vm1047, %v872, %v1179
  %v1308 = vsel %vm1048, %v875, %v1180
  %v1309 = vsel %vm1049, %v878, %v1181
  %v1310 = vsel %vm1050, %v881, %v1182
  %v1311 = vsel %vm1051, %v884, %v1183
  %v1312 = vsel %vm1052, %v887, %v1184
  %v1313 = vsel %vm1053, %v890, %v1185
  %v1314 = vsel %vm1054, %v893, %v1186
  %v1315 = vsel %vm1055, %v896, %v1187
  %v1316 = vsel %vm1056, %v899, %v1188
  %v1317 = vsel %vm1057, %v902, %v1189
  %v1318 = vsel %vm1058, %v905, %v1190
  %v1319 = vsel %vm1059, %v908, %v1191
  %v1320 = vsel %vm1060, %v911, %v1192
  %v1321 = vsel %vm1061, %v914, %v1193
  %v1322 = vsel %vm1062, %v917, %v1194
  %v1323 = vsel %vm1063, %v920, %v1195
  %v1324 = vsel %vm1064, %v923, %v1196
  %v1325 = vsel %vm1065, %v926, %v1197
  %v1326 = vsel %vm1066, %v929, %v1198
  %v1327 = vsel %vm1067, %v932, %v1199
  %v1328 = vsel %vm1068, %v935, %v1200
  %v1329 = vsel %vm1069, %v938, %v1201
  %v1330 = vsel %vm1070, %v941, %v1202
  %vm1331 = vcmask 130048
  %1332 = vst.msk [vmem:[%s4] sm:$0xff] %vm1331, %v1203
  %1333 = vst.msk [vmem:[%s4 + $0x8] sm:$0xff] %vm1331, %v1204
  %1334 = vst.msk [vmem:[%s4 + $0x10] sm:$0xff] %vm1331, %v1205
  %1335 = vst.msk [vmem:[%s4 + $0x18] sm:$0xff] %vm1331, %v1206
  %1336 = vst.msk [vmem:[%s4 + $0x20] sm:$0xff] %vm1331, %v1207
  %1337 = vst.msk [vmem:[%s4 + $0x28] sm:$0xff] %vm1331, %v1208
  %1338 = vst.msk [vmem:[%s4 + $0x30] sm:$0xff] %vm1331, %v1209
  %1339 = vst.msk [vmem:[%s4 + $0x38] sm:$0xff] %vm1331, %v1210
  %1340 = vst.msk [vmem:[%s4 + $0x40] sm:$0xff] %vm1331, %v1211
  %1341 = vst.msk [vmem:[%s4 + $0x48] sm:$0xff] %vm1331, %v1212
  %1342 = vst.msk [vmem:[%s4 + $0x50] sm:$0xff] %vm1331, %v1213
  %1343 = vst.msk [vmem:[%s4 + $0x58] sm:$0xff] %vm1331, %v1214
  %1344 = vst.msk [vmem:[%s4 + $0x60] sm:$0xff] %vm1331, %v1215
  %1345 = vst.msk [vmem:[%s4 + $0x68] sm:$0xff] %vm1331, %v1216
  %1346 = vst.msk [vmem:[%s4 + $0x70] sm:$0xff] %vm1331, %v1217
  %1347 = vst.msk [vmem:[%s4 + $0x78] sm:$0xff] %vm1331, %v1218
  %1348 = vst.msk [vmem:[%s4 + $0x80] sm:$0xff] %vm1331, %v1219
  %1349 = vst.msk [vmem:[%s4 + $0x88] sm:$0xff] %vm1331, %v1220
  %1350 = vst.msk [vmem:[%s4 + $0x90] sm:$0xff] %vm1331, %v1221
  %1351 = vst.msk [vmem:[%s4 + $0x98] sm:$0xff] %vm1331, %v1222
  %1352 = vst.msk [vmem:[%s4 + $0xa0] sm:$0xff] %vm1331, %v1223
  %1353 = vst.msk [vmem:[%s4 + $0xa8] sm:$0xff] %vm1331, %v1224
  %1354 = vst.msk [vmem:[%s4 + $0xb0] sm:$0xff] %vm1331, %v1225
  %1355 = vst.msk [vmem:[%s4 + $0xb8] sm:$0xff] %vm1331, %v1226
  %1356 = vst.msk [vmem:[%s4 + $0xc0] sm:$0xff] %vm1331, %v1227
  %1357 = vst.msk [vmem:[%s4 + $0xc8] sm:$0xff] %vm1331, %v1228
  %1358 = vst.msk [vmem:[%s4 + $0xd0] sm:$0xff] %vm1331, %v1229
  %1359 = vst.msk [vmem:[%s4 + $0xd8] sm:$0xff] %vm1331, %v1230
  %1360 = vst.msk [vmem:[%s4 + $0xe0] sm:$0xff] %vm1331, %v1231
  %1361 = vst.msk [vmem:[%s4 + $0xe8] sm:$0xff] %vm1331, %v1232
  %1362 = vst.msk [vmem:[%s4 + $0xf0] sm:$0xff] %vm1331, %v1233
  %1363 = vst.msk [vmem:[%s4 + $0xf8] sm:$0xff] %vm1331, %v1234
  %1364 = vst.msk [vmem:[%s4 + $0x100] sm:$0xff] %vm1331, %v1235
  %1365 = vst.msk [vmem:[%s4 + $0x108] sm:$0xff] %vm1331, %v1236
  %1366 = vst.msk [vmem:[%s4 + $0x110] sm:$0xff] %vm1331, %v1237
  %1367 = vst.msk [vmem:[%s4 + $0x118] sm:$0xff] %vm1331, %v1238
  %1368 = vst.msk [vmem:[%s4 + $0x120] sm:$0xff] %vm1331, %v1239
  %1369 = vst.msk [vmem:[%s4 + $0x128] sm:$0xff] %vm1331, %v1240
  %1370 = vst.msk [vmem:[%s4 + $0x130] sm:$0xff] %vm1331, %v1241
  %1371 = vst.msk [vmem:[%s4 + $0x138] sm:$0xff] %vm1331, %v1242
  %1372 = vst.msk [vmem:[%s4 + $0x140] sm:$0xff] %vm1331, %v1243
  %1373 = vst.msk [vmem:[%s4 + $0x148] sm:$0xff] %vm1331, %v1244
  %1374 = vst.msk [vmem:[%s4 + $0x150] sm:$0xff] %vm1331, %v1245
  %1375 = vst.msk [vmem:[%s4 + $0x158] sm:$0xff] %vm1331, %v1246
  %1376 = vst.msk [vmem:[%s4 + $0x160] sm:$0xff] %vm1331, %v1247
  %1377 = vst.msk [vmem:[%s4 + $0x168] sm:$0xff] %vm1331, %v1248
  %1378 = vst.msk [vmem:[%s4 + $0x170] sm:$0xff] %vm1331, %v1249
  %1379 = vst.msk [vmem:[%s4 + $0x178] sm:$0xff] %vm1331, %v1250
  %1380 = vst.msk [vmem:[%s4 + $0x180] sm:$0xff] %vm1331, %v1251
  %1381 = vst.msk [vmem:[%s4 + $0x188] sm:$0xff] %vm1331, %v1252
  %1382 = vst.msk [vmem:[%s4 + $0x190] sm:$0xff] %vm1331, %v1253
  %1383 = vst.msk [vmem:[%s4 + $0x198] sm:$0xff] %vm1331, %v1254
  %1384 = vst.msk [vmem:[%s4 + $0x1a0] sm:$0xff] %vm1331, %v1255
  %1385 = vst.msk [vmem:[%s4 + $0x1a8] sm:$0xff] %vm1331, %v1256
  %1386 = vst.msk [vmem:[%s4 + $0x1b0] sm:$0xff] %vm1331, %v1257
  %1387 = vst.msk [vmem:[%s4 + $0x1b8] sm:$0xff] %vm1331, %v1258
  %1388 = vst.msk [vmem:[%s4 + $0x1c0] sm:$0xff] %vm1331, %v1259
  %1389 = vst.msk [vmem:[%s4 + $0x1c8] sm:$0xff] %vm1331, %v1260
  %1390 = vst.msk [vmem:[%s4 + $0x1d0] sm:$0xff] %vm1331, %v1261
  %1391 = vst.msk [vmem:[%s4 + $0x1d8] sm:$0xff] %vm1331, %v1262
  %1392 = vst.msk [vmem:[%s4 + $0x1e0] sm:$0xff] %vm1331, %v1263
  %1393 = vst.msk [vmem:[%s4 + $0x1e8] sm:$0xff] %vm1331, %v1264
  %1394 = vst.msk [vmem:[%s4 + $0x1f0] sm:$0xff] %vm1331, %v1265
  %1395 = vst.msk [vmem:[%s4 + $0x1f8] sm:$0xff] %vm1331, %v1266
  %1396 = vst.msk [vmem:[%s4 + $0x200] sm:$0xff] %vm1331, %v1267
  %1397 = vst.msk [vmem:[%s4 + $0x208] sm:$0xff] %vm1331, %v1268
  %1398 = vst.msk [vmem:[%s4 + $0x210] sm:$0xff] %vm1331, %v1269
  %1399 = vst.msk [vmem:[%s4 + $0x218] sm:$0xff] %vm1331, %v1270
  %1400 = vst.msk [vmem:[%s4 + $0x220] sm:$0xff] %vm1331, %v1271
  %1401 = vst.msk [vmem:[%s4 + $0x228] sm:$0xff] %vm1331, %v1272
  %1402 = vst.msk [vmem:[%s4 + $0x230] sm:$0xff] %vm1331, %v1273
  %1403 = vst.msk [vmem:[%s4 + $0x238] sm:$0xff] %vm1331, %v1274
  %1404 = vst.msk [vmem:[%s4 + $0x240] sm:$0xff] %vm1331, %v1275
  %1405 = vst.msk [vmem:[%s4 + $0x248] sm:$0xff] %vm1331, %v1276
  %1406 = vst.msk [vmem:[%s4 + $0x250] sm:$0xff] %vm1331, %v1277
  %1407 = vst.msk [vmem:[%s4 + $0x258] sm:$0xff] %vm1331, %v1278
  %1408 = vst.msk [vmem:[%s4 + $0x260] sm:$0xff] %vm1331, %v1279
  %1409 = vst.msk [vmem:[%s4 + $0x268] sm:$0xff] %vm1331, %v1280
  %1410 = vst.msk [vmem:[%s4 + $0x270] sm:$0xff] %vm1331, %v1281
  %1411 = vst.msk [vmem:[%s4 + $0x278] sm:$0xff] %vm1331, %v1282
  %1412 = vst.msk [vmem:[%s4 + $0x280] sm:$0xff] %vm1331, %v1283
  %1413 = vst.msk [vmem:[%s4 + $0x288] sm:$0xff] %vm1331, %v1284
  %1414 = vst.msk [vmem:[%s4 + $0x290] sm:$0xff] %vm1331, %v1285
  %1415 = vst.msk [vmem:[%s4 + $0x298] sm:$0xff] %vm1331, %v1286
  %1416 = vst.msk [vmem:[%s4 + $0x2a0] sm:$0xff] %vm1331, %v1287
  %1417 = vst.msk [vmem:[%s4 + $0x2a8] sm:$0xff] %vm1331, %v1288
  %1418 = vst.msk [vmem:[%s4 + $0x2b0] sm:$0xff] %vm1331, %v1289
  %1419 = vst.msk [vmem:[%s4 + $0x2b8] sm:$0xff] %vm1331, %v1290
  %1420 = vst.msk [vmem:[%s4 + $0x2c0] sm:$0xff] %vm1331, %v1291
  %1421 = vst.msk [vmem:[%s4 + $0x2c8] sm:$0xff] %vm1331, %v1292
  %1422 = vst.msk [vmem:[%s4 + $0x2d0] sm:$0xff] %vm1331, %v1293
  %1423 = vst.msk [vmem:[%s4 + $0x2d8] sm:$0xff] %vm1331, %v1294
  %1424 = vst.msk [vmem:[%s4 + $0x2e0] sm:$0xff] %vm1331, %v1295
  %1425 = vst.msk [vmem:[%s4 + $0x2e8] sm:$0xff] %vm1331, %v1296
  %1426 = vst.msk [vmem:[%s4 + $0x2f0] sm:$0xff] %vm1331, %v1297
  %1427 = vst.msk [vmem:[%s4 + $0x2f8] sm:$0xff] %vm1331, %v1298
  %1428 = vst.msk [vmem:[%s4 + $0x300] sm:$0xff] %vm1331, %v1299
  %1429 = vst.msk [vmem:[%s4 + $0x308] sm:$0xff] %vm1331, %v1300
  %1430 = vst.msk [vmem:[%s4 + $0x310] sm:$0xff] %vm1331, %v1301
  %1431 = vst.msk [vmem:[%s4 + $0x318] sm:$0xff] %vm1331, %v1302
  %1432 = vst.msk [vmem:[%s4 + $0x320] sm:$0xff] %vm1331, %v1303
  %1433 = vst.msk [vmem:[%s4 + $0x328] sm:$0xff] %vm1331, %v1304
  %1434 = vst.msk [vmem:[%s4 + $0x330] sm:$0xff] %vm1331, %v1305
  %1435 = vst.msk [vmem:[%s4 + $0x338] sm:$0xff] %vm1331, %v1306
  %1436 = vst.msk [vmem:[%s4 + $0x340] sm:$0xff] %vm1331, %v1307
  %1437 = vst.msk [vmem:[%s4 + $0x348] sm:$0xff] %vm1331, %v1308
  %1438 = vst.msk [vmem:[%s4 + $0x350] sm:$0xff] %vm1331, %v1309
  %1439 = vst.msk [vmem:[%s4 + $0x358] sm:$0xff] %vm1331, %v1310
  %1440 = vst.msk [vmem:[%s4 + $0x360] sm:$0xff] %vm1331, %v1311
  %1441 = vst.msk [vmem:[%s4 + $0x368] sm:$0xff] %vm1331, %v1312
  %1442 = vst.msk [vmem:[%s4 + $0x370] sm:$0xff] %vm1331, %v1313
  %1443 = vst.msk [vmem:[%s4 + $0x378] sm:$0xff] %vm1331, %v1314
  %1444 = vst.msk [vmem:[%s4 + $0x380] sm:$0xff] %vm1331, %v1315
  %1445 = vst.msk [vmem:[%s4 + $0x388] sm:$0xff] %vm1331, %v1316
  %1446 = vst.msk [vmem:[%s4 + $0x390] sm:$0xff] %vm1331, %v1317
  %1447 = vst.msk [vmem:[%s4 + $0x398] sm:$0xff] %vm1331, %v1318
  %1448 = vst.msk [vmem:[%s4 + $0x3a0] sm:$0xff] %vm1331, %v1319
  %1449 = vst.msk [vmem:[%s4 + $0x3a8] sm:$0xff] %vm1331, %v1320
  %1450 = vst.msk [vmem:[%s4 + $0x3b0] sm:$0xff] %vm1331, %v1321
  %1451 = vst.msk [vmem:[%s4 + $0x3b8] sm:$0xff] %vm1331, %v1322
  %1452 = vst.msk [vmem:[%s4 + $0x3c0] sm:$0xff] %vm1331, %v1323
  %1453 = vst.msk [vmem:[%s4 + $0x3c8] sm:$0xff] %vm1331, %v1324
  %1454 = vst.msk [vmem:[%s4 + $0x3d0] sm:$0xff] %vm1331, %v1325
  %1455 = vst.msk [vmem:[%s4 + $0x3d8] sm:$0xff] %vm1331, %v1326
  %1456 = vst.msk [vmem:[%s4 + $0x3e0] sm:$0xff] %vm1331, %v1327
  %1457 = vst.msk [vmem:[%s4 + $0x3e8] sm:$0xff] %vm1331, %v1328
  %1458 = vst.msk [vmem:[%s4 + $0x3f0] sm:$0xff] %vm1331, %v1329
  %1459 = vst.msk [vmem:[%s4 + $0x3f8] sm:$0xff] %vm1331, %v1330
  // Predicated region
  $region18: #{tpu_custom_call.1} parent=0 // pred_check
    _
  $region19: #{tpu_custom_call.1} parent=0 // pred_check_branch
    %1461 = sbr.rel (0) target = $region21
  $region20: #{tpu_custom_call.1} parent=0 // pred_region
    _
  $region21: #{tpu_custom_call.1} parent=0 // pred_fallthru
    _
  // Predicated region
  $region22: #{tpu_custom_call.1} parent=0 // pred_check
    _
  $region23: #{tpu_custom_call.1} parent=0 // pred_check_branch
    %1463 = sbr.rel (0) target = $region25
  $region24: #{tpu_custom_call.1} parent=0 // pred_region
    _
  $region25: #{tpu_custom_call.1} parent=0 // pred_fallthru
    _

</llo_original>
